<compile_context>
chip_gen: v7x
topology: tpu7x:2x2x1
jax: 0.10.0
libtpu: 0.0.40
codegen_flags: <defaults>
</compile_context>

<pallas_src>
import math

import jax
import jax.numpy as jnp
from jax.experimental import pallas as pl
from jax.experimental.pallas import tpu as pltpu


# ----------------------------------------------------------------------------
# Pallas kernel: one row-tile per grid step.
#   circular conv1d (k=3) == [x_prev | x | x_next] @ [W0; W1; W2]  (+ bias),
#   taps stacked host-side, bias pre-folded into the PE tile.
# ----------------------------------------------------------------------------
def _data_embedding_kernel(x_ref, w_ref, pe_ref, o_ref):
    y = jnp.dot(x_ref[...], w_ref[...], preferred_element_type=jnp.float32)  # (T, Dp)
    o_ref[...] = (y + pe_ref[...]).astype(o_ref.dtype)


def _vmem_capacity_bytes():
    try:
        return int(pltpu.get_tpu_info().vmem_capacity_bytes)
    except Exception:
        return 64 << 20          # conservative fallback (v7x-sized VMEM)


def _tensorcores_per_chip():
    try:
        dev = jax.devices()[0]
        n = getattr(dev, "num_cores", None)
        if isinstance(n, int) and n > 1:
            return n
        if "v7" in str(getattr(dev, "device_kind", "")).lower():
            return 2
    except Exception:
        pass
    return 1


def data_embedding_forward(x, conv_weight, conv_bias, pe, *, out_dtype=jnp.float32):
    """DataEmbedding forward.

    x: (B, L, C) float; conv_weight: (D, C, 3); conv_bias: (D,); pe: (max_len, D).
    Returns (B, L, D) in `out_dtype` (pass jnp.bfloat16 if the consumer accepts
    it -- this kernel is HBM-writeback-bound, so bf16 output ~halves its traffic).
    """
    B, L, C = x.shape
    D = conv_weight.shape[0]
    Dp = -(-D // 128) * 128                      # lane-dense output width
    N = B * L
    out_bytes = jnp.dtype(out_dtype).itemsize

    # --- host-side glue -------------------------------------------------------
    # Circular taps stacked on the host (input traffic is ~1% of output traffic).
    x = x.astype(jnp.float32)
    x_cat = jnp.concatenate(
        [jnp.roll(x, 1, axis=1), x, jnp.roll(x, -1, axis=1)], axis=-1)       # (B, L, 3C)
    x_flat = x_cat.reshape(N, 3 * C)

    # Fused conv-tap weight matrix (3C, Dp), tap order [prev, center, next].
    w_t = jnp.transpose(conv_weight, (2, 1, 0)).reshape(3 * C, D).astype(jnp.float32)
    w_t = jnp.pad(w_t, ((0, 0), (0, Dp - D)))

    # Conv bias folded into the positional-embedding tile, padded to Dp.
    pe_b = pe[:L].astype(jnp.float32) + conv_bias.astype(jnp.float32)[None, :]
    pe_b = jnp.pad(pe_b, ((0, 0), (0, Dp - D)))

    # --- tile-size selection (generation-aware VMEM budget) --------------------
    vmem_cap = _vmem_capacity_bytes()
    budget = int(vmem_cap * 0.65)   # ~83 MiB on v5e/v6e (128 MiB), ~42 MiB on v7x (64 MiB)

    def bytes_for(t):
        return (2 * t * 3 * C * 4        # double-buffered x tiles
                + 2 * t * Dp * out_bytes  # double-buffered output tiles
                + 3 * C * Dp * 4          # resident fused weights
                + 2 * t * Dp * 4          # PE tiles (conservative: double-buffered)
                + t * Dp * 4              # in-kernel f32 matmul result
                + t * 3 * C * 4)          # in-kernel x load

    # Row-tile candidates: divide B*L, stay sequence-aligned (so the PE block
    # mapping is a simple block index), and satisfy the (8, 128) tiling rule.
    cands = [t for t in range(8, N + 1, 8)
             if N % t == 0 and (t % L == 0 or L % t == 0)]
    if N not in cands:
        cands.append(N)                   # full extent is always legal
    fitting = [t for t in cands if bytes_for(t) <= budget] or [min(cands)]
    if _tensorcores_per_chip() > 1:
        multi = [t for t in fitting if N // t >= 2]   # keep both cores busy on v7x
        T = max(multi) if multi else max(fitting)
    else:
        T = max(fitting)                  # single TC: biggest tile wins

    # --- PE operand: resident (tile covers whole sequences) or tiled over L ----
    if T % L == 0:
        pe_in = jnp.tile(pe_b, (T // L, 1)) if T > L else pe_b    # (T, Dp), constant block
        pe_resident = True
        n_per_seq = 1
    else:                                 # T < L and T | L
        pe_in = pe_b                                              # (L, Dp)
        pe_resident = False
        n_per_seq = L // T

    def _call(single_buffer_resident):
        resident_kw = ({"pipeline_mode": pl.Buffered(1)}
                       if single_buffer_resident else {})
        w_spec = pl.BlockSpec((3 * C, Dp), lambda i: (0, 0), **resident_kw)
        if pe_resident:
            pe_spec = pl.BlockSpec((T, Dp), lambda i: (0, 0), **resident_kw)
        else:
            pe_spec = pl.BlockSpec((T, Dp), lambda i: (i % n_per_seq, 0))
        return pl.pallas_call(
            _data_embedding_kernel,
            out_shape=jax.ShapeDtypeStruct((N, Dp), out_dtype),
            grid_spec=pltpu.PrefetchScalarGridSpec(
                num_scalar_prefetch=0,
                grid=(N // T,),
                in_specs=[
                    pl.BlockSpec((T, 3 * C), lambda i: (i, 0)),   # stacked circular taps
                    w_spec,                                        # fused conv weights
                    pe_spec,                                       # PE + folded bias
                ],
                out_specs=pl.BlockSpec((T, Dp), lambda i: (i, 0)),
            ),
            compiler_params=pltpu.CompilerParams(
                dimension_semantics=("parallel",),
                vmem_limit_bytes=budget,
            ),
        )(x_flat, w_t, pe_in)

    try:
        out = _call(True)
    except Exception:
        # Fallback: default (double-buffered) pipelining for the resident operands.
        out = _call(False)

    out = out.reshape(B, L, Dp)
    if Dp == D:
        return out                        # no extra copy when d_model % 128 == 0
    # TODO(synk): for D % 128 != 0 this slice is an extra HBM round-trip; callers
    # that can consume the padded (B, L, Dp) buffer should take it directly.
    return out[..., :D]


# ----------------------------------------------------------------------------
# Deterministic parameter construction (matches module __init__ shapes)
# ----------------------------------------------------------------------------
def make_params(key, c_in, d_model, max_len=5000):
    k_w, k_b = jax.random.split(key)

    # Conv1d weight: (d_model, c_in, 3), kaiming_normal_(fan_in, leaky_relu)
    fan_in = c_in * 3
    gain = math.sqrt(2.0 / (1.0 + 0.01 ** 2))     # leaky_relu default slope
    std = gain / math.sqrt(fan_in)
    conv_weight = std * jax.random.normal(k_w, (d_model, c_in, 3), jnp.float32)

    # Conv1d bias: default PyTorch init U(-1/sqrt(fan_in), 1/sqrt(fan_in))
    bound = 1.0 / math.sqrt(fan_in)
    conv_bias = jax.random.uniform(k_b, (d_model,), jnp.float32, -bound, bound)

    # Positional embedding table (deterministic, no RNG)
    position = jnp.arange(max_len, dtype=jnp.float32)[:, None]
    div_term = jnp.exp(jnp.arange(0, d_model, 2, dtype=jnp.float32)
                       * (-(math.log(10000.0) / d_model)))
    pe = jnp.zeros((max_len, d_model), jnp.float32)
    pe = pe.at[:, 0::2].set(jnp.sin(position * div_term))
    pe = pe.at[:, 1::2].set(jnp.cos(position * div_term))
    return conv_weight, conv_bias, pe


# Pure-JAX reference for the correctness check.
def reference_forward(x, conv_weight, conv_bias, pe):
    B, L, C = x.shape
    x_prev = jnp.roll(x, 1, axis=1)
    x_next = jnp.roll(x, -1, axis=1)
    y = (jnp.einsum("blc,dc->bld", x_prev, conv_weight[:, :, 0])
         + jnp.einsum("blc,dc->bld", x, conv_weight[:, :, 1])
         + jnp.einsum("blc,dc->bld", x_next, conv_weight[:, :, 2]))
    return y + conv_bias[None, None, :] + pe[None, :L, :]


if __name__ == "__main__":
    B, L, c_in, d_model = 2, 8, 4, 32
    key = jax.random.PRNGKey(0)
    k_x, k_p = jax.random.split(key)

    x = jax.random.normal(k_x, (B, L, c_in), jnp.float32)
    conv_weight, conv_bias, pe = make_params(k_p, c_in, d_model, max_len=64)

    out = data_embedding_forward(x, conv_weight, conv_bias, pe)
    out = jax.block_until_ready(out)

    ref = reference_forward(x, conv_weight, conv_bias, pe)
    assert out.shape == (B, L, d_model)
    assert jnp.allclose(out, ref, atol=1e-5, rtol=1e-5)

    print("KERNEL_OK")
</pallas_src>

<mosaic_0001>
module attributes {stable_mosaic.version = 11 : i64} {
  func.func @_data_embedding_kernel(%arg0: i32, %arg1: memref<16x12xf32, #tpu.memory_space<vmem>>, %arg2: memref<12x128xf32, #tpu.memory_space<vmem>>, %arg3: memref<16x128xf32, #tpu.memory_space<vmem>>, %arg4: memref<16x128xf32, #tpu.memory_space<vmem>>) attributes {dimension_semantics = [#tpu.dimension_semantics<parallel>], iteration_bounds = array<i64: 1>, scalar_prefetch = 0 : i64, scratch_operands = 0 : i64, tpu.core_type = #tpu.core_type<tc>, window_params = [{transform_indices = @transform_0, window_bounds = array<i64: 16, 12>}, {pipeline_mode = #tpu.pipeline_mode<synchronous>, transform_indices = @transform_1, window_bounds = array<i64: 12, 128>}, {pipeline_mode = #tpu.pipeline_mode<synchronous>, transform_indices = @transform_2, window_bounds = array<i64: 16, 128>}, {transform_indices = @transform_3, window_bounds = array<i64: 16, 128>}]} {
    %c0 = arith.constant 0 : index
    %c0_0 = arith.constant 0 : index
    %0 = vector.load %arg1[%c0, %c0_0] : memref<16x12xf32, #tpu.memory_space<vmem>>, vector<16x12xf32>
    %c0_1 = arith.constant 0 : index
    %c0_2 = arith.constant 0 : index
    %1 = vector.load %arg2[%c0_1, %c0_2] : memref<12x128xf32, #tpu.memory_space<vmem>>, vector<12x128xf32>
    %cst = arith.constant dense<0.000000e+00> : vector<16x128xf32>
    %2 = tpu.matmul %0, %1, %cst {dimension_numbers = #tpu.dot_dimension_numbers<[1], [0], [0], [1], [0, 0, 1, 1], [], []>} : vector<16x12xf32>, vector<12x128xf32>, vector<16x128xf32> -> vector<16x128xf32>
    %c0_3 = arith.constant 0 : index
    %c0_4 = arith.constant 0 : index
    %3 = vector.load %arg3[%c0_3, %c0_4] : memref<16x128xf32, #tpu.memory_space<vmem>>, vector<16x128xf32>
    %4 = arith.addf %2, %3 : vector<16x128xf32>
    %c0_5 = arith.constant 0 : index
    %c0_6 = arith.constant 0 : index
    %5 = vector.load %arg4[%c0_5, %c0_6] : memref<16x128xf32, #tpu.memory_space<vmem>>, vector<16x128xf32>
    tpu.vector_store %arg4[%c0_5, %c0_6], %4 {strides = array<i32>} : memref<16x128xf32, #tpu.memory_space<vmem>>, vector<16x128xf32>,
    return
  }
  func.func @transform_0(%arg0: i32) -> (i32, i32) {
    %c0_i32 = arith.constant 0 : i32
    %c0_i32_0 = arith.constant 0 : i32
    return %arg0, %c0_i32 : i32, i32
  }
  func.func @transform_1(%arg0: i32) -> (i32, i32) {
    %c0_i32 = arith.constant 0 : i32
    %c0_i32_0 = arith.constant 0 : i32
    %c0_i32_1 = arith.constant 0 : i32
    return %c0_i32, %c0_i32_0 : i32, i32
  }
  func.func @transform_2(%arg0: i32) -> (i32, i32) {
    %c0_i32 = arith.constant 0 : i32
    %c0_i32_0 = arith.constant 0 : i32
    %c0_i32_1 = arith.constant 0 : i32
    return %c0_i32, %c0_i32_0 : i32, i32
  }
  func.func @transform_3(%arg0: i32) -> (i32, i32) {
    %c0_i32 = arith.constant 0 : i32
    %c0_i32_0 = arith.constant 0 : i32
    return %arg0, %c0_i32 : i32, i32
  }
}

module attributes {stable_mosaic.version = 11 : i64} {
  func.func @_data_embedding_kernel(%arg0: i32, %arg1: memref<16x12xf32, #tpu.memory_space<vmem>>, %arg2: memref<12x128xf32, #tpu.memory_space<vmem>>, %arg3: memref<16x128xf32, #tpu.memory_space<vmem>>, %arg4: memref<16x128xf32, #tpu.memory_space<vmem>>) attributes {dimension_semantics = [#tpu.dimension_semantics<parallel>], iteration_bounds = array<i64: 1>, scalar_prefetch = 0 : i64, scratch_operands = 0 : i64, tpu.core_type = #tpu.core_type<tc>, window_params = [{transform_indices = @transform_0, window_bounds = array<i64: 16, 12>}, {pipeline_mode = #tpu.pipeline_mode<synchronous>, transform_indices = @transform_1, window_bounds = array<i64: 12, 128>}, {pipeline_mode = #tpu.pipeline_mode<synchronous>, transform_indices = @transform_2, window_bounds = array<i64: 16, 128>}, {transform_indices = @transform_3, window_bounds = array<i64: 16, 128>}]} {
    %c0 = arith.constant 0 : index
    %c0_0 = arith.constant 0 : index
    %0 = vector.load %arg1[%c0, %c0_0] : memref<16x12xf32, #tpu.memory_space<vmem>>, vector<16x12xf32>
    %c0_1 = arith.constant 0 : index
    %c0_2 = arith.constant 0 : index
    %1 = vector.load %arg2[%c0_1, %c0_2] : memref<12x128xf32, #tpu.memory_space<vmem>>, vector<12x128xf32>
    %cst = arith.constant dense<0.000000e+00> : vector<16x128xf32>
    %2 = tpu.matmul %0, %1, %cst {dimension_numbers = #tpu.dot_dimension_numbers<[1], [0], [0], [1], [0, 0, 1, 1], [], []>} : vector<16x12xf32>, vector<12x128xf32>, vector<16x128xf32> -> vector<16x128xf32>
    %c0_3 = arith.constant 0 : index
    %c0_4 = arith.constant 0 : index
    %3 = vector.load %arg3[%c0_3, %c0_4] : memref<16x128xf32, #tpu.memory_space<vmem>>, vector<16x128xf32>
    %4 = arith.addf %2, %3 : vector<16x128xf32>
    %c0_5 = arith.constant 0 : index
    %c0_6 = arith.constant 0 : index
    %5 = vector.load %arg4[%c0_5, %c0_6] : memref<16x128xf32, #tpu.memory_space<vmem>>, vector<16x128xf32>
    tpu.vector_store %arg4[%c0_5, %c0_6], %4 {strides = array<i32>} : memref<16x128xf32, #tpu.memory_space<vmem>>, vector<16x128xf32>,
    return
  }
  func.func @transform_0(%arg0: i32) -> (i32, i32) {
    %c0_i32 = arith.constant 0 : i32
    %c0_i32_0 = arith.constant 0 : i32
    return %arg0, %c0_i32 : i32, i32
  }
  func.func @transform_1(%arg0: i32) -> (i32, i32) {
    %c0_i32 = arith.constant 0 : i32
    %c0_i32_0 = arith.constant 0 : i32
    %c0_i32_1 = arith.constant 0 : i32
    return %c0_i32, %c0_i32_0 : i32, i32
  }
  func.func @transform_2(%arg0: i32) -> (i32, i32) {
    %c0_i32 = arith.constant 0 : i32
    %c0_i32_0 = arith.constant 0 : i32
    %c0_i32_1 = arith.constant 0 : i32
    return %c0_i32, %c0_i32_0 : i32, i32
  }
  func.func @transform_3(%arg0: i32) -> (i32, i32) {
    %c0_i32 = arith.constant 0 : i32
    %c0_i32_0 = arith.constant 0 : i32
    return %arg0, %c0_i32 : i32, i32
  }
}

</mosaic_0001>

<llo_original>
// kernel: tpu_custom_call.1
$region0: #{tpu_custom_call.1}
  #allocation0 [shape = 'u32[]', space=smem, size = 0x4, offset = 0x4, fixed_abs, tag = 'smem constant byte address 0x4 - core index']
  #allocation1 [shape = 'u32[144,128]{1,0:T(1,128)}', space=vmem, size = 0x12000, scoped, tag = 'internal scratch']
  %s0 = inlined_call_operand.hbm [shape: f32[16,12], index: 0, kind: input, shape index: {}]
  %s1 = inlined_call_operand.hbm [shape: f32[12,128], index: 1, kind: input, shape index: {}]
  %s2 = inlined_call_operand.hbm [shape: f32[16,128], index: 2, kind: input, shape index: {}]
  %s3 = inlined_call_operand.hbm [shape: f32[16,128], index: 3, kind: output, shape index: {}]
  %s4 = sld [smem:[#allocation0]]
  $region34: #{tpu_custom_call.1} parent=0
    _
  %s6 = ssub.s32 1, %s4
  %s7 = scalar_select 0, %s6, %s4
  $region1: #{tpu_custom_call.1} parent=0
    #allocation2 [shape = 'u8[8192]{0}', space=vmem, size = 0x2000, scoped, tag = 'input window, operand 0, single buffered']
    #allocation3 [shape = 's32[1]{0}', space=sflag, size = 0x4, scoped, tag = 'scoped memory for tpu_custom_call.1']
    #allocation4 [shape = 's32[1]{0}', space=sflag, size = 0x4, scoped, tag = 'scoped memory for tpu_custom_call.1']
    #allocation5 [shape = 'u8[8192]{0}', space=vmem, size = 0x2000, scoped, tag = 'input window, operand 1, single buffered']
    #allocation6 [shape = 's32[1]{0}', space=sflag, size = 0x4, scoped, tag = 'scoped memory for tpu_custom_call.1']
    #allocation7 [shape = 'u8[8192]{0}', space=vmem, size = 0x2000, scoped, tag = 'input window, operand 2, single buffered']
    #allocation8 [shape = 'u8[8192]{0}', space=vmem, size = 0x2000, scoped, tag = 'output window, operand 0, single buffered']
    %8 = vsyncpa [#allocation3], 0
    %9 = vsyncpa [#allocation6], 0
    %10 = vsyncpa [#allocation4], 0
    // Predicated region
    $region2: #{tpu_custom_call.1} parent=1 // pred_check
      _
    $region3: #{tpu_custom_call.1} parent=1 // pred_check_branch
      %12 = sbr.rel (0) target = $region5
    $region4: #{tpu_custom_call.1} parent=1 // pred_region
      %s14 = ssub.s32 256, 256
      %15 = vsyncadd [#allocation3], %s14
      %s16 = sshll.u32 [#allocation2], 4
      %s17 = int_to_ptr.vmem [resolvable:$true] %s16
      %22 = dma.hbm_to_vmem [thread:$0]  %s0, 256, %s17, [#allocation3], 128, 128, 8
    $region5: #{tpu_custom_call.1} parent=1 // pred_fallthru
      _
    // Predicated region
    $region6: #{tpu_custom_call.1} parent=1 // pred_check
      _
    $region7: #{tpu_custom_call.1} parent=1 // pred_check_branch
      %24 = sbr.rel (0) target = $region9
    $region8: #{tpu_custom_call.1} parent=1 // pred_region
      %s26 = ssub.s32 256, 256
      %27 = vsyncadd [#allocation6], %s26
      %s28 = sshll.u32 [#allocation5], 4
      %s29 = int_to_ptr.vmem [resolvable:$true] %s28
      %34 = dma.hbm_to_vmem [thread:$0]  %s1, 256, %s29, [#allocation6], 128, 128, 8
    $region9: #{tpu_custom_call.1} parent=1 // pred_fallthru
      _
    // Predicated region
    $region10: #{tpu_custom_call.1} parent=1 // pred_check
      _
    $region11: #{tpu_custom_call.1} parent=1 // pred_check_branch
      %36 = sbr.rel (0) target = $region13
    $region12: #{tpu_custom_call.1} parent=1 // pred_region
      %s38 = ssub.s32 256, 256
      %39 = vsyncadd [#allocation6], %s38
      %s40 = sshll.u32 [#allocation7], 4
      %s41 = int_to_ptr.vmem [resolvable:$true] %s40
      %46 = dma.hbm_to_vmem [thread:$0]  %s2, 256, %s41, [#allocation6], 128, 128, 8
    $region13: #{tpu_custom_call.1} parent=1 // pred_fallthru
      _
    // Predicated region
    $region14: #{tpu_custom_call.1} parent=1 // pred_check
      _
    $region15: #{tpu_custom_call.1} parent=1 // pred_check_branch
      %48 = sbr.rel (0) target = $region17
    $region16: #{tpu_custom_call.1} parent=1 // pred_region
      %49 = dma.done [#allocation3], 256
    $region17: #{tpu_custom_call.1} parent=1 // pred_fallthru
      _
    // Predicated region
    $region18: #{tpu_custom_call.1} parent=1 // pred_check
      _
    $region19: #{tpu_custom_call.1} parent=1 // pred_check_branch
      %51 = sbr.rel (0) target = $region21
    $region20: #{tpu_custom_call.1} parent=1 // pred_region
      %52 = dma.done [#allocation6], 256
    $region21: #{tpu_custom_call.1} parent=1 // pred_fallthru
      _
    // Predicated region
    $region22: #{tpu_custom_call.1} parent=1 // pred_check
      _
    $region23: #{tpu_custom_call.1} parent=1 // pred_check_branch
      %54 = sbr.rel (0) target = $region25
    $region24: #{tpu_custom_call.1} parent=1 // pred_region
      %55 = dma.done [#allocation6], 256
    $region25: #{tpu_custom_call.1} parent=1 // pred_fallthru
      _
    %v56 = vld [vmem:[#allocation2] sm:$0xff]
    %v57 = vld [vmem:[#allocation2 + $0x8] sm:$0xff]
    %v58 = vld [vmem:[#allocation5] sm:$0xff]
    %v59 = vld [vmem:[#allocation5 + $0x8] sm:$0xf]
    %v60 = vld [vmem:[#allocation7] sm:$0xff]
    %v61 = vld [vmem:[#allocation7 + $0x8] sm:$0xff]
    %vm62 = vcmask 97280
    %v64 = vsel %vm62, %v56, 0
    %v67 = vsel %vm62, %v57, 0
    %vm69 = vcmask 1043456
    %v71 = vsel %vm69, %v59, 0
    %73 = vmatprep.subr.mxu0 0.0
    %74 = vmatpush1.msra.mxu0 %v58
    %75 = vmatprep.subr.mxu0 0.0
    %76 = vmatpush1.msra.mxu0 %v71
    %77 = vmatprep.subr.mxu0 0.0
    %78 = vmatpush1.msra.mxu0 0.0
    %79 = vmatprep.subr.mxu0 0.0
    %80 = vmatpush1.msra.mxu0 0.0
    %81 = vmatprep.subr.mxu0 0.0
    %82 = vmatpush1.msra.mxu0 0.0
    %83 = vmatprep.subr.mxu0 0.0
    %84 = vmatpush1.msra.mxu0 0.0
    %85 = vmatprep.subr.mxu0 0.0
    %86 = vmatpush1.msra.mxu0 0.0
    %87 = vmatprep.subr.mxu0 0.0
    %88 = vmatpush1.msra.mxu0 0.0
    %89 = vmatprep.subr.mxu0 0.0
    %90 = vmatpush1.msra.mxu0 0.0
    %91 = vmatprep.subr.mxu0 0.0
    %92 = vmatpush1.msra.mxu0 0.0
    %93 = vmatprep.subr.mxu0 0.0
    %94 = vmatpush1.msra.mxu0 0.0
    %95 = vmatprep.subr.mxu0 0.0
    %96 = vmatpush1.msra.mxu0 0.0
    %97 = vmatprep.subr.mxu0 0.0
    %98 = vmatpush1.msra.mxu0 0.0
    %99 = vmatprep.subr.mxu0 0.0
    %100 = vmatpush1.msra.mxu0 0.0
    %101 = vmatprep.subr.mxu0 0.0
    %102 = vmatpush1.msra.mxu0 0.0
    %103 = vmatprep.subr.mxu0 0.0
    %104 = vmatpush1.msra.mxu0 0.0
    %105 = vmatprep.subr.mxu0 0.0
    %106 = vmatpush1.msra.mxu0 0.0
    %107 = vmatprep.subr.mxu0 0.0
    %108 = vmatpush1.msra.mxu0 0.0
    %109 = vmatprep.subr.mxu0 0.0
    %110 = vmatpush1.msra.mxu0 0.0
    %111 = vmatprep.subr.mxu0 0.0
    %112 = vmatpush1.msra.mxu0 0.0
    %113 = vmatprep.subr.mxu0 0.0
    %114 = vmatpush1.msra.mxu0 0.0
    %115 = vmatprep.subr.mxu0 0.0
    %116 = vmatpush1.msra.mxu0 0.0
    %117 = vmatprep.subr.mxu0 0.0
    %118 = vmatpush1.msra.mxu0 0.0
    %119 = vmatprep.subr.mxu0 0.0
    %120 = vmatpush1.msra.mxu0 0.0
    %121 = vmatprep.subr.mxu0 0.0
    %122 = vmatpush1.msra.mxu0 0.0
    %123 = vmatprep.subr.mxu0 0.0
    %124 = vmatpush1.msra.mxu0 0.0
    %125 = vmatprep.subr.mxu0 0.0
    %126 = vmatpush1.msra.mxu0 0.0
    %127 = vmatprep.subr.mxu0 0.0
    %128 = vmatpush1.msra.mxu0 0.0
    %129 = vmatprep.subr.mxu0 0.0
    %130 = vmatpush1.msra.mxu0 0.0
    %131 = vmatprep.subr.mxu0 0.0
    %132 = vmatpush1.msra.mxu0 0.0
    %133 = vmatprep.subr.mxu0 0.0
    %134 = vmatpush1.msra.mxu0 0.0
    %135 = vmatprep.subr.mxu0 0.0
    %136 = vmatpush1.msra.mxu0 0.0
    %137 = vmatprep.mubr.f32.mxu0 0.0
    %138 = vmatmul.mubr.f32.gmra.mrb[0].mxu0 %v64
    %v139 = vpop.f32.mrb[0].mxu0
    %v140 = vadd.f32 %v60, %v139
    %v141 = vpop.f32.mrb[0].mxu0
    %142 = vmatprep.mubr.f32.mxu0 0.0
    %143 = vmatmul.mubr.f32.gmra.mrb[0].mxu0 %v67
    %v144 = vpop.f32.mrb[0].mxu0
    %v145 = vadd.f32 %v61, %v144
    %v146 = vpop.f32.mrb[0].mxu0
    %147 = vdwg.mxu0
    %148 = vst [vmem:[#allocation8] sm:$0xff] %v140
    %149 = vst [vmem:[#allocation8 + $0x8] sm:$0xff] %v145
    // Predicated region
    $region26: #{tpu_custom_call.1} parent=1 // pred_check
      _
    $region27: #{tpu_custom_call.1} parent=1 // pred_check_branch
      %151 = sbr.rel (0) target = $region29
    $region28: #{tpu_custom_call.1} parent=1 // pred_region
      %s153 = ssub.s32 256, 256
      %154 = vsyncadd [#allocation4], %s153
      %s155 = sshll.u32 [#allocation8], 4
      %s156 = int_to_ptr.vmem [resolvable:$true] %s155
      %161 = dma.vmem_to_hbm [thread:$0]  %s156, 256, %s3, [#allocation4], 128, 128, 8
    $region29: #{tpu_custom_call.1} parent=1 // pred_fallthru
      _
    // Predicated region
    $region30: #{tpu_custom_call.1} parent=1 // pred_check
      _
    $region31: #{tpu_custom_call.1} parent=1 // pred_check_branch
      %163 = sbr.rel (0) target = $region33
    $region32: #{tpu_custom_call.1} parent=1 // pred_region
      %164 = dma.done [#allocation4], 256
    $region33: #{tpu_custom_call.1} parent=1 // pred_fallthru
      _
    %165 = vsyncpa [#allocation3], 1
    %166 = vsyncpa [#allocation6], 1
    %167 = vsyncpa [#allocation4], 1

// kernel: tpu_custom_call.1
$region0: #{tpu_custom_call.1}
  #allocation0 [shape = 'u32[]', space=smem, size = 0x4, offset = 0x4, fixed_abs, tag = 'smem constant byte address 0x4 - core index']
  #allocation1 [shape = 'u32[144,128]{1,0:T(1,128)}', space=vmem, size = 0x12000, scoped, tag = 'internal scratch']
  %s0 = inlined_call_operand.hbm [shape: f32[16,12], index: 0, kind: input, shape index: {}]
  %s1 = inlined_call_operand.hbm [shape: f32[12,128], index: 1, kind: input, shape index: {}]
  %s2 = inlined_call_operand.hbm [shape: f32[16,128], index: 2, kind: input, shape index: {}]
  %s3 = inlined_call_operand.hbm [shape: f32[16,128], index: 3, kind: output, shape index: {}]
  %s4 = sld [smem:[#allocation0]]
  $region34: #{tpu_custom_call.1} parent=0
    _
  %s6 = ssub.s32 1, %s4
  %s7 = scalar_select 0, %s6, %s4
  $region1: #{tpu_custom_call.1} parent=0
    #allocation2 [shape = 'u8[8192]{0}', space=vmem, size = 0x2000, scoped, tag = 'input window, operand 0, single buffered']
    #allocation3 [shape = 's32[1]{0}', space=sflag, size = 0x4, scoped, tag = 'scoped memory for tpu_custom_call.1']
    #allocation4 [shape = 's32[1]{0}', space=sflag, size = 0x4, scoped, tag = 'scoped memory for tpu_custom_call.1']
    #allocation5 [shape = 'u8[8192]{0}', space=vmem, size = 0x2000, scoped, tag = 'input window, operand 1, single buffered']
    #allocation6 [shape = 's32[1]{0}', space=sflag, size = 0x4, scoped, tag = 'scoped memory for tpu_custom_call.1']
    #allocation7 [shape = 'u8[8192]{0}', space=vmem, size = 0x2000, scoped, tag = 'input window, operand 2, single buffered']
    #allocation8 [shape = 'u8[8192]{0}', space=vmem, size = 0x2000, scoped, tag = 'output window, operand 0, single buffered']
    %8 = vsyncpa [#allocation3], 0
    %9 = vsyncpa [#allocation6], 0
    %10 = vsyncpa [#allocation4], 0
    // Predicated region
    $region2: #{tpu_custom_call.1} parent=1 // pred_check
      _
    $region3: #{tpu_custom_call.1} parent=1 // pred_check_branch
      %12 = sbr.rel (0) target = $region5
    $region4: #{tpu_custom_call.1} parent=1 // pred_region
      %s14 = ssub.s32 256, 256
      %15 = vsyncadd [#allocation3], %s14
      %s16 = sshll.u32 [#allocation2], 4
      %s17 = int_to_ptr.vmem [resolvable:$true] %s16
      %22 = dma.hbm_to_vmem [thread:$0]  %s0, 256, %s17, [#allocation3], 128, 128, 8
    $region5: #{tpu_custom_call.1} parent=1 // pred_fallthru
      _
    // Predicated region
    $region6: #{tpu_custom_call.1} parent=1 // pred_check
      _
    $region7: #{tpu_custom_call.1} parent=1 // pred_check_branch
      %24 = sbr.rel (0) target = $region9
    $region8: #{tpu_custom_call.1} parent=1 // pred_region
      %s26 = ssub.s32 256, 256
      %27 = vsyncadd [#allocation6], %s26
      %s28 = sshll.u32 [#allocation5], 4
      %s29 = int_to_ptr.vmem [resolvable:$true] %s28
      %34 = dma.hbm_to_vmem [thread:$0]  %s1, 256, %s29, [#allocation6], 128, 128, 8
    $region9: #{tpu_custom_call.1} parent=1 // pred_fallthru
      _
    // Predicated region
    $region10: #{tpu_custom_call.1} parent=1 // pred_check
      _
    $region11: #{tpu_custom_call.1} parent=1 // pred_check_branch
      %36 = sbr.rel (0) target = $region13
    $region12: #{tpu_custom_call.1} parent=1 // pred_region
      %s38 = ssub.s32 256, 256
      %39 = vsyncadd [#allocation6], %s38
      %s40 = sshll.u32 [#allocation7], 4
      %s41 = int_to_ptr.vmem [resolvable:$true] %s40
      %46 = dma.hbm_to_vmem [thread:$0]  %s2, 256, %s41, [#allocation6], 128, 128, 8
    $region13: #{tpu_custom_call.1} parent=1 // pred_fallthru
      _
    // Predicated region
    $region14: #{tpu_custom_call.1} parent=1 // pred_check
      _
    $region15: #{tpu_custom_call.1} parent=1 // pred_check_branch
      %48 = sbr.rel (0) target = $region17
    $region16: #{tpu_custom_call.1} parent=1 // pred_region
      %49 = dma.done [#allocation3], 256
    $region17: #{tpu_custom_call.1} parent=1 // pred_fallthru
      _
    // Predicated region
    $region18: #{tpu_custom_call.1} parent=1 // pred_check
      _
    $region19: #{tpu_custom_call.1} parent=1 // pred_check_branch
      %51 = sbr.rel (0) target = $region21
    $region20: #{tpu_custom_call.1} parent=1 // pred_region
      %52 = dma.done [#allocation6], 256
    $region21: #{tpu_custom_call.1} parent=1 // pred_fallthru
      _
    // Predicated region
    $region22: #{tpu_custom_call.1} parent=1 // pred_check
      _
    $region23: #{tpu_custom_call.1} parent=1 // pred_check_branch
      %54 = sbr.rel (0) target = $region25
    $region24: #{tpu_custom_call.1} parent=1 // pred_region
      %55 = dma.done [#allocation6], 256
    $region25: #{tpu_custom_call.1} parent=1 // pred_fallthru
      _
    %v56 = vld [vmem:[#allocation2] sm:$0xff]
    %v57 = vld [vmem:[#allocation2 + $0x8] sm:$0xff]
    %v58 = vld [vmem:[#allocation5] sm:$0xff]
    %v59 = vld [vmem:[#allocation5 + $0x8] sm:$0xf]
    %v60 = vld [vmem:[#allocation7] sm:$0xff]
    %v61 = vld [vmem:[#allocation7 + $0x8] sm:$0xff]
    %vm62 = vcmask 97280
    %v64 = vsel %vm62, %v56, 0
    %v67 = vsel %vm62, %v57, 0
    %vm69 = vcmask 1043456
    %v71 = vsel %vm69, %v59, 0
    %73 = vmatprep.subr.mxu0 0.0
    %74 = vmatpush1.msra.mxu0 %v58
    %75 = vmatprep.subr.mxu0 0.0
    %76 = vmatpush1.msra.mxu0 %v71
    %77 = vmatprep.subr.mxu0 0.0
    %78 = vmatpush1.msra.mxu0 0.0
    %79 = vmatprep.subr.mxu0 0.0
    %80 = vmatpush1.msra.mxu0 0.0
    %81 = vmatprep.subr.mxu0 0.0
    %82 = vmatpush1.msra.mxu0 0.0
    %83 = vmatprep.subr.mxu0 0.0
    %84 = vmatpush1.msra.mxu0 0.0
    %85 = vmatprep.subr.mxu0 0.0
    %86 = vmatpush1.msra.mxu0 0.0
    %87 = vmatprep.subr.mxu0 0.0
    %88 = vmatpush1.msra.mxu0 0.0
    %89 = vmatprep.subr.mxu0 0.0
    %90 = vmatpush1.msra.mxu0 0.0
    %91 = vmatprep.subr.mxu0 0.0
    %92 = vmatpush1.msra.mxu0 0.0
    %93 = vmatprep.subr.mxu0 0.0
    %94 = vmatpush1.msra.mxu0 0.0
    %95 = vmatprep.subr.mxu0 0.0
    %96 = vmatpush1.msra.mxu0 0.0
    %97 = vmatprep.subr.mxu0 0.0
    %98 = vmatpush1.msra.mxu0 0.0
    %99 = vmatprep.subr.mxu0 0.0
    %100 = vmatpush1.msra.mxu0 0.0
    %101 = vmatprep.subr.mxu0 0.0
    %102 = vmatpush1.msra.mxu0 0.0
    %103 = vmatprep.subr.mxu0 0.0
    %104 = vmatpush1.msra.mxu0 0.0
    %105 = vmatprep.subr.mxu0 0.0
    %106 = vmatpush1.msra.mxu0 0.0
    %107 = vmatprep.subr.mxu0 0.0
    %108 = vmatpush1.msra.mxu0 0.0
    %109 = vmatprep.subr.mxu0 0.0
    %110 = vmatpush1.msra.mxu0 0.0
    %111 = vmatprep.subr.mxu0 0.0
    %112 = vmatpush1.msra.mxu0 0.0
    %113 = vmatprep.subr.mxu0 0.0
    %114 = vmatpush1.msra.mxu0 0.0
    %115 = vmatprep.subr.mxu0 0.0
    %116 = vmatpush1.msra.mxu0 0.0
    %117 = vmatprep.subr.mxu0 0.0
    %118 = vmatpush1.msra.mxu0 0.0
    %119 = vmatprep.subr.mxu0 0.0
    %120 = vmatpush1.msra.mxu0 0.0
    %121 = vmatprep.subr.mxu0 0.0
    %122 = vmatpush1.msra.mxu0 0.0
    %123 = vmatprep.subr.mxu0 0.0
    %124 = vmatpush1.msra.mxu0 0.0
    %125 = vmatprep.subr.mxu0 0.0
    %126 = vmatpush1.msra.mxu0 0.0
    %127 = vmatprep.subr.mxu0 0.0
    %128 = vmatpush1.msra.mxu0 0.0
    %129 = vmatprep.subr.mxu0 0.0
    %130 = vmatpush1.msra.mxu0 0.0
    %131 = vmatprep.subr.mxu0 0.0
    %132 = vmatpush1.msra.mxu0 0.0
    %133 = vmatprep.subr.mxu0 0.0
    %134 = vmatpush1.msra.mxu0 0.0
    %135 = vmatprep.subr.mxu0 0.0
    %136 = vmatpush1.msra.mxu0 0.0
    %137 = vmatprep.mubr.f32.mxu0 0.0
    %138 = vmatmul.mubr.f32.gmra.mrb[0].mxu0 %v64
    %v139 = vpop.f32.mrb[0].mxu0
    %v140 = vadd.f32 %v60, %v139
    %v141 = vpop.f32.mrb[0].mxu0
    %142 = vmatprep.mubr.f32.mxu0 0.0
    %143 = vmatmul.mubr.f32.gmra.mrb[0].mxu0 %v67
    %v144 = vpop.f32.mrb[0].mxu0
    %v145 = vadd.f32 %v61, %v144
    %v146 = vpop.f32.mrb[0].mxu0
    %147 = vdwg.mxu0
    %148 = vst [vmem:[#allocation8] sm:$0xff] %v140
    %149 = vst [vmem:[#allocation8 + $0x8] sm:$0xff] %v145
    // Predicated region
    $region26: #{tpu_custom_call.1} parent=1 // pred_check
      _
    $region27: #{tpu_custom_call.1} parent=1 // pred_check_branch
      %151 = sbr.rel (0) target = $region29
    $region28: #{tpu_custom_call.1} parent=1 // pred_region
      %s153 = ssub.s32 256, 256
      %154 = vsyncadd [#allocation4], %s153
      %s155 = sshll.u32 [#allocation8], 4
      %s156 = int_to_ptr.vmem [resolvable:$true] %s155
      %161 = dma.vmem_to_hbm [thread:$0]  %s156, 256, %s3, [#allocation4], 128, 128, 8
    $region29: #{tpu_custom_call.1} parent=1 // pred_fallthru
      _
    // Predicated region
    $region30: #{tpu_custom_call.1} parent=1 // pred_check
      _
    $region31: #{tpu_custom_call.1} parent=1 // pred_check_branch
      %163 = sbr.rel (0) target = $region33
    $region32: #{tpu_custom_call.1} parent=1 // pred_region
      %164 = dma.done [#allocation4], 256
    $region33: #{tpu_custom_call.1} parent=1 // pred_fallthru
      _
    %165 = vsyncpa [#allocation3], 1
    %166 = vsyncpa [#allocation6], 1
    %167 = vsyncpa [#allocation4], 1

</llo_original>
